<compile_context>
chip_gen: v5e
topology: v5e:2x2
jax: 0.10.0
libtpu: 0.0.40
codegen_flags: <defaults>
</compile_context>

<pallas_src>
import functools

import jax
import jax.numpy as jnp
import numpy as np
from jax.experimental import pallas as pl
from jax.experimental.pallas import tpu as pltpu


def cholesky_vector_size(actions: int) -> int:
    return actions * (actions + 1) // 2


def _actor_kernel(state_ref, g_ref, beta_ref,
                  w1_ref, b1_ref, w2_ref, b2_ref, w3_ref, b3_ref,
                  wh_ref, bh_ref, selm_ref, selc_ref,
                  out_ref):
    x = state_ref[...].astype(jnp.float32)

    # LayerNorm over the feature axis (biased variance, eps=1e-5, affine).
    mu = jnp.mean(x, axis=-1, keepdims=True)
    var = jnp.mean((x - mu) * (x - mu), axis=-1, keepdims=True)
    xn = (x - mu) * jax.lax.rsqrt(var + 1e-5)
    xn = xn * g_ref[...] + beta_ref[...]

    # tanh -> 3x (Linear + ReLU); bf16 operands into the MXU, f32 accumulate.
    h = jnp.tanh(xn).astype(jnp.bfloat16)
    h = jnp.dot(h, w1_ref[...], preferred_element_type=jnp.float32) + b1_ref[...]
    h = jnp.maximum(h, 0.0).astype(jnp.bfloat16)
    h = jnp.dot(h, w2_ref[...], preferred_element_type=jnp.float32) + b2_ref[...]
    h = jnp.maximum(h, 0.0).astype(jnp.bfloat16)
    h = jnp.dot(h, w3_ref[...], preferred_element_type=jnp.float32) + b3_ref[...]
    h = jnp.maximum(h, 0.0).astype(jnp.bfloat16)

    # Fused head: one lane-dense (TILE_B, 128) matmul + per-column activation
    # selection.  sel_mean picks sigmoid columns, sel_chol picks the dense
    # lower-triangular softplus columns (tril mask applied AFTER softplus);
    # padding columns are zeroed by both masks.
    y = jnp.dot(h, wh_ref[...], preferred_element_type=jnp.float32) + bh_ref[...]
    out_ref[...] = (selm_ref[...] * jax.nn.sigmoid(y)
                    + selc_ref[...] * jnp.logaddexp(y, 0.0))


@functools.partial(jax.jit, static_argnames=("actions",))
def actor_continuous_forward(state, params, actions):
    B, obs = state.shape
    A = actions
    head_width = params["wh"].shape[1]

    # Batch tiling: multiples of 8 sublanes; cap at 256 rows per grid step
    # (fits comfortably in v7x's 64 MiB VMEM, full MXU occupancy on v6e/v7x).
    TILE_B = 256 if B >= 256 else max(8, ((B + 7) // 8) * 8)
    B_pad = ((B + TILE_B - 1) // TILE_B) * TILE_B
    state_p = state if B_pad == B else jnp.pad(state, ((0, B_pad - B), (0, 0)))
    grid = (B_pad // TILE_B,)

    def resident(p):
        # Full-array block, constant index map -> stays resident across the
        # batch grid (no re-DMA per tile).
        return pl.BlockSpec(p.shape, lambda i: (0, 0))

    in_specs = [
        pl.BlockSpec((TILE_B, obs), lambda i: (i, 0)),
        resident(params["ln_gamma"]), resident(params["ln_beta"]),
        resident(params["w1"]), resident(params["b1"]),
        resident(params["w2"]), resident(params["b2"]),
        resident(params["w3"]), resident(params["b3"]),
        resident(params["wh"]), resident(params["bh"]),
        resident(params["sel_mean"]), resident(params["sel_chol"]),
    ]

    out = pl.pallas_call(
        _actor_kernel,
        out_shape=jax.ShapeDtypeStruct((B_pad, head_width), jnp.float32),
        grid_spec=pltpu.PrefetchScalarGridSpec(
            num_scalar_prefetch=0,
            grid=grid,
            in_specs=in_specs,
            out_specs=pl.BlockSpec((TILE_B, head_width), lambda i: (i, 0)),
        ),
        compiler_params=pltpu.CompilerParams(
            dimension_semantics=("parallel",)),
    )(state_p,
      params["ln_gamma"], params["ln_beta"],
      params["w1"], params["b1"],
      params["w2"], params["b2"],
      params["w3"], params["b3"],
      params["wh"], params["bh"],
      params["sel_mean"], params["sel_chol"])

    out = out[:B]
    mean = out[:, :A]
    chol = out[:, A:A + A * A].reshape(B, A, A)  # dense row-major lower-tri
    return mean, chol


def init_params(key, observations, actions):
    """Deterministic synthetic parameters matching the module's shapes,
    with the two output heads fused/pre-scattered into one lane-dense head."""
    A = actions
    chol_size = cholesky_vector_size(A)
    ks = jax.random.split(key, 12)

    def unif(k, shape, scale):
        return jax.random.uniform(k, shape, jnp.float32, -scale, scale)

    ln_gamma = (jnp.ones((1, observations), jnp.float32)
                + 0.01 * jax.random.normal(ks[0], (1, observations)))
    ln_beta = 0.01 * jax.random.normal(ks[1], (1, observations))
    w1 = unif(ks[2], (observations, 256), 0.003)
    b1 = unif(ks[3], (1, 256), 1.0 / np.sqrt(observations))
    w2 = unif(ks[4], (256, 256), 0.003)
    b2 = unif(ks[5], (1, 256), 1.0 / np.sqrt(256))
    w3 = unif(ks[6], (256, 128), 0.003)
    b3 = unif(ks[7], (1, 128), 1.0 / np.sqrt(256))
    wm = unif(ks[8], (128, A), 0.003)
    bm = unif(ks[9], (1, A), 1.0 / np.sqrt(128))
    wc = unif(ks[10], (128, chol_size), 0.003)
    bc = unif(ks[11], (1, chol_size), 1.0 / np.sqrt(128))

    # Fused head: [mean columns | dense A*A cholesky columns | zero padding]
    head_width = max(128, ((A + A * A + 127) // 128) * 128)
    rows, cols = np.tril_indices(A)
    dense_idx = A + rows * A + cols  # column index inside the fused head
    wh = np.zeros((128, head_width), np.float32)
    bh = np.zeros((1, head_width), np.float32)
    wh[:, :A] = np.asarray(wm)
    bh[:, :A] = np.asarray(bm)
    wh[:, dense_idx] = np.asarray(wc)
    bh[:, dense_idx] = np.asarray(bc)
    sel_mean = np.zeros((1, head_width), np.float32)
    sel_mean[:, :A] = 1.0
    sel_chol = np.zeros((1, head_width), np.float32)
    sel_chol[:, dense_idx] = 1.0

    params = {
        "ln_gamma": ln_gamma, "ln_beta": ln_beta,
        "w1": w1.astype(jnp.bfloat16), "b1": b1,
        "w2": w2.astype(jnp.bfloat16), "b2": b2,
        "w3": w3.astype(jnp.bfloat16), "b3": b3,
        "wh": jnp.asarray(wh, jnp.bfloat16), "bh": jnp.asarray(bh),
        "sel_mean": jnp.asarray(sel_mean), "sel_chol": jnp.asarray(sel_chol),
    }
    return params


def _reference_forward(state, params, actions):
    """Pure-JAX (f32) reference using the same (bf16-rounded) weights."""
    A = actions
    rows, cols = np.tril_indices(A)
    dense_idx = A + rows * A + cols
    w1 = params["w1"].astype(jnp.float32)
    w2 = params["w2"].astype(jnp.float32)
    w3 = params["w3"].astype(jnp.float32)
    wh = params["wh"].astype(jnp.float32)
    bh = params["bh"]
    wm, bm = wh[:, :A], bh[:, :A]
    wc, bc = wh[:, dense_idx], bh[:, dense_idx]

    x = state
    mu = jnp.mean(x, axis=-1, keepdims=True)
    var = jnp.mean((x - mu) ** 2, axis=-1, keepdims=True)
    xn = (x - mu) / jnp.sqrt(var + 1e-5) * params["ln_gamma"] + params["ln_beta"]
    h = jnp.tanh(xn)
    h = jax.nn.relu(h @ w1 + params["b1"])
    h = jax.nn.relu(h @ w2 + params["b2"])
    h = jax.nn.relu(h @ w3 + params["b3"])
    mean = jax.nn.sigmoid(h @ wm + bm)
    cvec = jax.nn.softplus(h @ wc + bc)
    chol = jnp.zeros((state.shape[0], A, A), jnp.float32)
    chol = chol.at[:, rows, cols].set(cvec)
    return mean, chol


if __name__ == "__main__":
    batch = 2
    observations = 16
    actions = 4

    key = jax.random.PRNGKey(0)
    k_state, k_params = jax.random.split(key)
    state = jax.random.normal(k_state, (batch, observations), jnp.float32)
    params = init_params(k_params, observations, actions)

    mean, chol = actor_continuous_forward(state, params, actions)
    jax.block_until_ready((mean, chol))

    ref_mean, ref_chol = _reference_forward(state, params, actions)
    assert mean.shape == (batch, actions)
    assert chol.shape == (batch, actions, actions)
    # bf16 matmul operands -> loosened tolerance.
    np.testing.assert_allclose(np.asarray(mean), np.asarray(ref_mean),
                               rtol=2e-2, atol=2e-2)
    np.testing.assert_allclose(np.asarray(chol), np.asarray(ref_chol),
                               rtol=2e-2, atol=2e-2)

    print("KERNEL_OK")
</pallas_src>

<mosaic_0001>
module attributes {stable_mosaic.version = 11 : i64} {
  func.func @_actor_kernel(%arg0: i32, %arg1: memref<8x16xf32, #tpu.memory_space<vmem>>, %arg2: memref<1x16xf32, #tpu.memory_space<vmem>>, %arg3: memref<1x16xf32, #tpu.memory_space<vmem>>, %arg4: memref<16x256xbf16, #tpu.memory_space<vmem>>, %arg5: memref<1x256xf32, #tpu.memory_space<vmem>>, %arg6: memref<256x256xbf16, #tpu.memory_space<vmem>>, %arg7: memref<1x256xf32, #tpu.memory_space<vmem>>, %arg8: memref<256x128xbf16, #tpu.memory_space<vmem>>, %arg9: memref<1x128xf32, #tpu.memory_space<vmem>>, %arg10: memref<128x128xbf16, #tpu.memory_space<vmem>>, %arg11: memref<1x128xf32, #tpu.memory_space<vmem>>, %arg12: memref<1x128xf32, #tpu.memory_space<vmem>>, %arg13: memref<1x128xf32, #tpu.memory_space<vmem>>, %arg14: memref<8x128xf32, #tpu.memory_space<vmem>>) attributes {dimension_semantics = [#tpu.dimension_semantics<parallel>], iteration_bounds = array<i64: 1>, scalar_prefetch = 0 : i64, scratch_operands = 0 : i64, tpu.core_type = #tpu.core_type<tc>, window_params = [{transform_indices = @transform_0, window_bounds = array<i64: 8, 16>}, {pipeline_mode = #tpu.pipeline_mode<synchronous>, transform_indices = @transform_1, window_bounds = array<i64: 1, 16>}, {pipeline_mode = #tpu.pipeline_mode<synchronous>, transform_indices = @transform_2, window_bounds = array<i64: 1, 16>}, {pipeline_mode = #tpu.pipeline_mode<synchronous>, transform_indices = @transform_3, window_bounds = array<i64: 16, 256>}, {pipeline_mode = #tpu.pipeline_mode<synchronous>, transform_indices = @transform_4, window_bounds = array<i64: 1, 256>}, {pipeline_mode = #tpu.pipeline_mode<synchronous>, transform_indices = @transform_5, window_bounds = array<i64: 256, 256>}, {pipeline_mode = #tpu.pipeline_mode<synchronous>, transform_indices = @transform_6, window_bounds = array<i64: 1, 256>}, {pipeline_mode = #tpu.pipeline_mode<synchronous>, transform_indices = @transform_7, window_bounds = array<i64: 256, 128>}, {pipeline_mode = #tpu.pipeline_mode<synchronous>, transform_indices = @transform_8, window_bounds = array<i64: 1, 128>}, {pipeline_mode = #tpu.pipeline_mode<synchronous>, transform_indices = @transform_9, window_bounds = array<i64: 128, 128>}, {pipeline_mode = #tpu.pipeline_mode<synchronous>, transform_indices = @transform_10, window_bounds = array<i64: 1, 128>}, {pipeline_mode = #tpu.pipeline_mode<synchronous>, transform_indices = @transform_11, window_bounds = array<i64: 1, 128>}, {pipeline_mode = #tpu.pipeline_mode<synchronous>, transform_indices = @transform_12, window_bounds = array<i64: 1, 128>}, {transform_indices = @transform_13, window_bounds = array<i64: 8, 128>}]} {
    %c0 = arith.constant 0 : index
    %c0_0 = arith.constant 0 : index
    %0 = vector.load %arg1[%c0, %c0_0] : memref<8x16xf32, #tpu.memory_space<vmem>>, vector<8x16xf32>
    %cst = arith.constant dense<0.000000e+00> : vector<8xf32>
    %1 = vector.multi_reduction <add>, %0, %cst [1] : vector<8x16xf32> to vector<8xf32>
    %2 = vector.shape_cast %1 : vector<8xf32> to vector<8x1xf32>
    %cst_1 = arith.constant 1.600000e+01 : f32
    %3 = vector.broadcast %cst_1 : f32 to vector<8x1xf32>
    %4 = arith.divf %2, %3 : vector<8x1xf32>
    %5 = vector.broadcast %4 : vector<8x1xf32> to vector<8x16xf32>
    %6 = arith.subf %0, %5 : vector<8x16xf32>
    %7 = vector.broadcast %4 : vector<8x1xf32> to vector<8x16xf32>
    %8 = arith.subf %0, %7 : vector<8x16xf32>
    %9 = arith.mulf %6, %8 : vector<8x16xf32>
    %cst_2 = arith.constant dense<0.000000e+00> : vector<8xf32>
    %10 = vector.multi_reduction <add>, %9, %cst_2 [1] : vector<8x16xf32> to vector<8xf32>
    %11 = vector.shape_cast %10 : vector<8xf32> to vector<8x1xf32>
    %cst_3 = arith.constant 1.600000e+01 : f32
    %12 = vector.broadcast %cst_3 : f32 to vector<8x1xf32>
    %13 = arith.divf %11, %12 : vector<8x1xf32>
    %14 = vector.broadcast %4 : vector<8x1xf32> to vector<8x16xf32>
    %15 = arith.subf %0, %14 : vector<8x16xf32>
    %cst_4 = arith.constant 9.99999974E-6 : f32
    %16 = vector.broadcast %cst_4 : f32 to vector<8x1xf32>
    %17 = arith.addf %13, %16 : vector<8x1xf32>
    %18 = math.rsqrt %17 : vector<8x1xf32>
    %19 = vector.broadcast %18 : vector<8x1xf32> to vector<8x16xf32>
    %20 = arith.mulf %15, %19 : vector<8x16xf32>
    %c0_5 = arith.constant 0 : index
    %c0_6 = arith.constant 0 : index
    %21 = vector.load %arg2[%c0_5, %c0_6] : memref<1x16xf32, #tpu.memory_space<vmem>>, vector<1x16xf32>
    %22 = vector.broadcast %21 : vector<1x16xf32> to vector<8x16xf32>
    %23 = arith.mulf %20, %22 : vector<8x16xf32>
    %c0_7 = arith.constant 0 : index
    %c0_8 = arith.constant 0 : index
    %24 = vector.load %arg3[%c0_7, %c0_8] : memref<1x16xf32, #tpu.memory_space<vmem>>, vector<1x16xf32>
    %25 = vector.broadcast %24 : vector<1x16xf32> to vector<8x16xf32>
    %26 = arith.addf %23, %25 : vector<8x16xf32>
    %27 = math.tanh %26 : vector<8x16xf32>
    %28 = arith.truncf %27 : vector<8x16xf32> to vector<8x16xbf16>
    %c0_9 = arith.constant 0 : index
    %c0_10 = arith.constant 0 : index
    %29 = vector.load %arg4[%c0_9, %c0_10] : memref<16x256xbf16, #tpu.memory_space<vmem>>, vector<16x256xbf16>
    %cst_11 = arith.constant dense<0.000000e+00> : vector<8x256xf32>
    %30 = tpu.matmul %28, %29, %cst_11 {dimension_numbers = #tpu.dot_dimension_numbers<[1], [0], [0], [1], [0, 0, 1, 1], [], []>} : vector<8x16xbf16>, vector<16x256xbf16>, vector<8x256xf32> -> vector<8x256xf32>
    %c0_12 = arith.constant 0 : index
    %c0_13 = arith.constant 0 : index
    %31 = vector.load %arg5[%c0_12, %c0_13] : memref<1x256xf32, #tpu.memory_space<vmem>>, vector<1x256xf32>
    %32 = vector.broadcast %31 : vector<1x256xf32> to vector<8x256xf32>
    %33 = arith.addf %30, %32 : vector<8x256xf32>
    %cst_14 = arith.constant 0.000000e+00 : f32
    %34 = vector.broadcast %cst_14 : f32 to vector<8x256xf32>
    %35 = arith.maximumf %33, %34 : vector<8x256xf32>
    %36 = arith.truncf %35 : vector<8x256xf32> to vector<8x256xbf16>
    %c0_15 = arith.constant 0 : index
    %c0_16 = arith.constant 0 : index
    %37 = vector.load %arg6[%c0_15, %c0_16] : memref<256x256xbf16, #tpu.memory_space<vmem>>, vector<256x256xbf16>
    %cst_17 = arith.constant dense<0.000000e+00> : vector<8x256xf32>
    %38 = tpu.matmul %36, %37, %cst_17 {dimension_numbers = #tpu.dot_dimension_numbers<[1], [0], [0], [1], [0, 0, 1, 1], [], []>} : vector<8x256xbf16>, vector<256x256xbf16>, vector<8x256xf32> -> vector<8x256xf32>
    %c0_18 = arith.constant 0 : index
    %c0_19 = arith.constant 0 : index
    %39 = vector.load %arg7[%c0_18, %c0_19] : memref<1x256xf32, #tpu.memory_space<vmem>>, vector<1x256xf32>
    %40 = vector.broadcast %39 : vector<1x256xf32> to vector<8x256xf32>
    %41 = arith.addf %38, %40 : vector<8x256xf32>
    %cst_20 = arith.constant 0.000000e+00 : f32
    %42 = vector.broadcast %cst_20 : f32 to vector<8x256xf32>
    %43 = arith.maximumf %41, %42 : vector<8x256xf32>
    %44 = arith.truncf %43 : vector<8x256xf32> to vector<8x256xbf16>
    %c0_21 = arith.constant 0 : index
    %c0_22 = arith.constant 0 : index
    %45 = vector.load %arg8[%c0_21, %c0_22] : memref<256x128xbf16, #tpu.memory_space<vmem>>, vector<256x128xbf16>
    %cst_23 = arith.constant dense<0.000000e+00> : vector<8x128xf32>
    %46 = tpu.matmul %44, %45, %cst_23 {dimension_numbers = #tpu.dot_dimension_numbers<[1], [0], [0], [1], [0, 0, 1, 1], [], []>} : vector<8x256xbf16>, vector<256x128xbf16>, vector<8x128xf32> -> vector<8x128xf32>
    %c0_24 = arith.constant 0 : index
    %c0_25 = arith.constant 0 : index
    %47 = vector.load %arg9[%c0_24, %c0_25] : memref<1x128xf32, #tpu.memory_space<vmem>>, vector<1x128xf32>
    %48 = vector.broadcast %47 : vector<1x128xf32> to vector<8x128xf32>
    %49 = arith.addf %46, %48 : vector<8x128xf32>
    %cst_26 = arith.constant 0.000000e+00 : f32
    %50 = vector.broadcast %cst_26 : f32 to vector<8x128xf32>
    %51 = arith.maximumf %49, %50 : vector<8x128xf32>
    %52 = arith.truncf %51 : vector<8x128xf32> to vector<8x128xbf16>
    %c0_27 = arith.constant 0 : index
    %c0_28 = arith.constant 0 : index
    %53 = vector.load %arg10[%c0_27, %c0_28] : memref<128x128xbf16, #tpu.memory_space<vmem>>, vector<128x128xbf16>
    %cst_29 = arith.constant dense<0.000000e+00> : vector<8x128xf32>
    %54 = tpu.matmul %52, %53, %cst_29 {dimension_numbers = #tpu.dot_dimension_numbers<[1], [0], [0], [1], [0, 0, 1, 1], [], []>} : vector<8x128xbf16>, vector<128x128xbf16>, vector<8x128xf32> -> vector<8x128xf32>
    %c0_30 = arith.constant 0 : index
    %c0_31 = arith.constant 0 : index
    %55 = vector.load %arg11[%c0_30, %c0_31] : memref<1x128xf32, #tpu.memory_space<vmem>>, vector<1x128xf32>
    %56 = vector.broadcast %55 : vector<1x128xf32> to vector<8x128xf32>
    %57 = arith.addf %54, %56 : vector<8x128xf32>
    %c0_32 = arith.constant 0 : index
    %c0_33 = arith.constant 0 : index
    %58 = vector.load %arg12[%c0_32, %c0_33] : memref<1x128xf32, #tpu.memory_space<vmem>>, vector<1x128xf32>
    %59 = arith.negf %57 : vector<8x128xf32>
    %60 = math.exp %59 : vector<8x128xf32>
    %cst_34 = arith.constant 1.000000e+00 : f32
    %61 = vector.broadcast %cst_34 : f32 to vector<8x128xf32>
    %62 = arith.addf %61, %60 : vector<8x128xf32>
    %63 = arith.divf %61, %62 : vector<8x128xf32>
    %64 = vector.broadcast %58 : vector<1x128xf32> to vector<8x128xf32>
    %65 = arith.mulf %64, %63 : vector<8x128xf32>
    %c0_35 = arith.constant 0 : index
    %c0_36 = arith.constant 0 : index
    %66 = vector.load %arg13[%c0_35, %c0_36] : memref<1x128xf32, #tpu.memory_space<vmem>>, vector<1x128xf32>
    %cst_37 = arith.constant 0.000000e+00 : f32
    %67 = vector.broadcast %cst_37 : f32 to vector<8x128xf32>
    %68 = arith.maximumf %57, %67 : vector<8x128xf32>
    %69 = vector.broadcast %cst_37 : f32 to vector<8x128xf32>
    %70 = arith.subf %57, %69 : vector<8x128xf32>
    %71 = arith.cmpf one, %70, %70 : vector<8x128xf32>
    %72 = vector.broadcast %cst_37 : f32 to vector<8x128xf32>
    %73 = arith.addf %57, %72 : vector<8x128xf32>
    %74 = math.absf %70 : vector<8x128xf32>
    %cst_38 = arith.constant 0.000000e+00 : f32
    %75 = vector.broadcast %cst_38 : f32 to vector<8x128xf32>
    %76 = arith.subf %75, %74 : vector<8x128xf32>
    %77 = math.exp %76 : vector<8x128xf32>
    %78 = math.log1p %77 : vector<8x128xf32>
    %79 = arith.addf %68, %78 : vector<8x128xf32>
    %80 = arith.select %71, %73, %79 : vector<8x128xi1>, vector<8x128xf32>
    %81 = vector.broadcast %66 : vector<1x128xf32> to vector<8x128xf32>
    %82 = arith.mulf %81, %80 : vector<8x128xf32>
    %83 = arith.addf %65, %82 : vector<8x128xf32>
    %c0_39 = arith.constant 0 : index
    %c0_40 = arith.constant 0 : index
    %84 = vector.load %arg14[%c0_39, %c0_40] : memref<8x128xf32, #tpu.memory_space<vmem>>, vector<8x128xf32>
    tpu.vector_store %arg14[%c0_39, %c0_40], %83 {strides = array<i32>} : memref<8x128xf32, #tpu.memory_space<vmem>>, vector<8x128xf32>,
    return
  }
  func.func @transform_0(%arg0: i32) -> (i32, i32) {
    %c0_i32 = arith.constant 0 : i32
    %c0_i32_0 = arith.constant 0 : i32
    return %arg0, %c0_i32 : i32, i32
  }
  func.func @transform_1(%arg0: i32) -> (i32, i32) {
    %c0_i32 = arith.constant 0 : i32
    %c0_i32_0 = arith.constant 0 : i32
    %c0_i32_1 = arith.constant 0 : i32
    return %c0_i32, %c0_i32_0 : i32, i32
  }
  func.func @transform_2(%arg0: i32) -> (i32, i32) {
    %c0_i32 = arith.constant 0 : i32
    %c0_i32_0 = arith.constant 0 : i32
    %c0_i32_1 = arith.constant 0 : i32
    return %c0_i32, %c0_i32_0 : i32, i32
  }
  func.func @transform_3(%arg0: i32) -> (i32, i32) {
    %c0_i32 = arith.constant 0 : i32
    %c0_i32_0 = arith.constant 0 : i32
    %c0_i32_1 = arith.constant 0 : i32
    return %c0_i32, %c0_i32_0 : i32, i32
  }
  func.func @transform_4(%arg0: i32) -> (i32, i32) {
    %c0_i32 = arith.constant 0 : i32
    %c0_i32_0 = arith.constant 0 : i32
    %c0_i32_1 = arith.constant 0 : i32
    return %c0_i32, %c0_i32_0 : i32, i32
  }
  func.func @transform_5(%arg0: i32) -> (i32, i32) {
    %c0_i32 = arith.constant 0 : i32
    %c0_i32_0 = arith.constant 0 : i32
    %c0_i32_1 = arith.constant 0 : i32
    return %c0_i32, %c0_i32_0 : i32, i32
  }
  func.func @transform_6(%arg0: i32) -> (i32, i32) {
    %c0_i32 = arith.constant 0 : i32
    %c0_i32_0 = arith.constant 0 : i32
    %c0_i32_1 = arith.constant 0 : i32
    return %c0_i32, %c0_i32_0 : i32, i32
  }
  func.func @transform_7(%arg0: i32) -> (i32, i32) {
    %c0_i32 = arith.constant 0 : i32
    %c0_i32_0 = arith.constant 0 : i32
    %c0_i32_1 = arith.constant 0 : i32
    return %c0_i32, %c0_i32_0 : i32, i32
  }
  func.func @transform_8(%arg0: i32) -> (i32, i32) {
    %c0_i32 = arith.constant 0 : i32
    %c0_i32_0 = arith.constant 0 : i32
    %c0_i32_1 = arith.constant 0 : i32
    return %c0_i32, %c0_i32_0 : i32, i32
  }
  func.func @transform_9(%arg0: i32) -> (i32, i32) {
    %c0_i32 = arith.constant 0 : i32
    %c0_i32_0 = arith.constant 0 : i32
    %c0_i32_1 = arith.constant 0 : i32
    return %c0_i32, %c0_i32_0 : i32, i32
  }
  func.func @transform_10(%arg0: i32) -> (i32, i32) {
    %c0_i32 = arith.constant 0 : i32
    %c0_i32_0 = arith.constant 0 : i32
    %c0_i32_1 = arith.constant 0 : i32
    return %c0_i32, %c0_i32_0 : i32, i32
  }
  func.func @transform_11(%arg0: i32) -> (i32, i32) {
    %c0_i32 = arith.constant 0 : i32
    %c0_i32_0 = arith.constant 0 : i32
    %c0_i32_1 = arith.constant 0 : i32
    return %c0_i32, %c0_i32_0 : i32, i32
  }
  func.func @transform_12(%arg0: i32) -> (i32, i32) {
    %c0_i32 = arith.constant 0 : i32
    %c0_i32_0 = arith.constant 0 : i32
    %c0_i32_1 = arith.constant 0 : i32
    return %c0_i32, %c0_i32_0 : i32, i32
  }
  func.func @transform_13(%arg0: i32) -> (i32, i32) {
    %c0_i32 = arith.constant 0 : i32
    %c0_i32_0 = arith.constant 0 : i32
    return %arg0, %c0_i32 : i32, i32
  }
}

</mosaic_0001>

<llo_original>
// kernel: actor_continuous_forward.1
$region0: #{actor_continuous_forward.1}
  #allocation0 [shape = 'u32[]', space=smem, size = 0x4, offset = 0x4, fixed_abs, tag = 'smem constant byte address 0x4 - core index']
  #allocation1 [shape = 'u32[72,128]{1,0:T(1,128)}', space=vmem, size = 0x9000, scoped, tag = 'internal scratch']
  %s0 = inlined_call_operand.vmem [shape: f32[8,16], index: 0, kind: input, shape index: {}]
  %s1 = inlined_call_operand.vmem [shape: f32[1,16], index: 1, kind: input, shape index: {}]
  %s2 = inlined_call_operand.hbm [shape: f32[1,16], index: 2, kind: input, shape index: {}]
  %s3 = inlined_call_operand.vmem [shape: bf16[16,256], index: 3, kind: input, shape index: {}]
  %s4 = inlined_call_operand.vmem [shape: f32[1,256], index: 4, kind: input, shape index: {}]
  %s5 = inlined_call_operand.hbm [shape: bf16[256,256], index: 5, kind: input, shape index: {}]
  %s6 = inlined_call_operand.hbm [shape: f32[1,256], index: 6, kind: input, shape index: {}]
  %s7 = inlined_call_operand.hbm [shape: bf16[256,128], index: 7, kind: input, shape index: {}]
  %s8 = inlined_call_operand.hbm [shape: f32[1,128], index: 8, kind: input, shape index: {}]
  %s9 = inlined_call_operand.hbm [shape: bf16[128,128], index: 9, kind: input, shape index: {}]
  %s10 = inlined_call_operand.hbm [shape: f32[1,128], index: 10, kind: input, shape index: {}]
  %s11 = inlined_call_operand.hbm [shape: f32[1,128], index: 11, kind: input, shape index: {}]
  %s12 = inlined_call_operand.hbm [shape: f32[1,128], index: 12, kind: input, shape index: {}]
  %s13 = inlined_call_operand.vmem [shape: f32[8,128], index: 13, kind: output, shape index: {}]
  %s14 = sld [smem:[#allocation0]]
  $region98: #{actor_continuous_forward.1} parent=0
    _
  %s16 = ssub.s32 1, %s14
  %s17 = scalar_select 0, %s16, %s14
  $region1: #{actor_continuous_forward.1} parent=0
    #allocation2 [shape = 'u8[512]{0}', space=vmem, size = 0x400, scoped, tag = 'input window, operand 2, single buffered']
    #allocation3 [shape = 's32[1]{0}', space=sflag, size = 0x4, scoped, tag = 'scoped memory for actor_continuous_forward.1']
    #allocation4 [shape = 'u8[131072]{0}', space=vmem, size = 0x20000, scoped, tag = 'input window, operand 5, single buffered']
    #allocation5 [shape = 's32[1]{0}', space=sflag, size = 0x4, scoped, tag = 'scoped memory for actor_continuous_forward.1']
    #allocation6 [shape = 'u8[1024]{0}', space=vmem, size = 0x400, scoped, tag = 'input window, operand 6, single buffered']
    #allocation7 [shape = 'u8[65536]{0}', space=vmem, size = 0x10000, scoped, tag = 'input window, operand 7, single buffered']
    #allocation8 [shape = 's32[1]{0}', space=sflag, size = 0x4, scoped, tag = 'scoped memory for actor_continuous_forward.1']
    #allocation9 [shape = 'u8[512]{0}', space=vmem, size = 0x400, scoped, tag = 'input window, operand 8, single buffered']
    #allocation10 [shape = 'u8[32768]{0}', space=vmem, size = 0x8000, scoped, tag = 'input window, operand 9, single buffered']
    #allocation11 [shape = 's32[1]{0}', space=sflag, size = 0x4, scoped, tag = 'scoped memory for actor_continuous_forward.1']
    #allocation12 [shape = 'u8[512]{0}', space=vmem, size = 0x400, scoped, tag = 'input window, operand 10, single buffered']
    #allocation13 [shape = 'u8[512]{0}', space=vmem, size = 0x400, scoped, tag = 'input window, operand 11, single buffered']
    #allocation14 [shape = 's32[1]{0}', space=sflag, size = 0x4, scoped, tag = 'scoped memory for actor_continuous_forward.1']
    #allocation15 [shape = 'u8[512]{0}', space=vmem, size = 0x400, scoped, tag = 'input window, operand 12, single buffered']
    %18 = vsyncpa [#allocation3], 0
    %19 = vsyncpa [#allocation5], 0
    %20 = vsyncpa [#allocation8], 0
    %21 = vsyncpa [#allocation11], 0
    %22 = vsyncpa [#allocation14], 0
    // Predicated region
    $region2: #{actor_continuous_forward.1} parent=1 // pred_check
      _
    $region3: #{actor_continuous_forward.1} parent=1 // pred_check_branch
      %24 = sbr.rel (0) target = $region5
    $region4: #{actor_continuous_forward.1} parent=1 // pred_region
      _
    $region5: #{actor_continuous_forward.1} parent=1 // pred_fallthru
      _
    // Predicated region
    $region6: #{actor_continuous_forward.1} parent=1 // pred_check
      _
    $region7: #{actor_continuous_forward.1} parent=1 // pred_check_branch
      %26 = sbr.rel (0) target = $region9
    $region8: #{actor_continuous_forward.1} parent=1 // pred_region
      _
    $region9: #{actor_continuous_forward.1} parent=1 // pred_fallthru
      _
    // Predicated region
    $region10: #{actor_continuous_forward.1} parent=1 // pred_check
      _
    $region11: #{actor_continuous_forward.1} parent=1 // pred_check_branch
      %28 = sbr.rel (0) target = $region13
    $region12: #{actor_continuous_forward.1} parent=1 // pred_region
      %30 = vsyncadd [#allocation3], 0
      %s32 = sshll.u32 %s2, 4
      %s33 = int_to_ptr.hbm [resolvable:$true] %s32
      %s34 = sshll.u32 [#allocation2], 4
      %s35 = int_to_ptr.vmem [resolvable:$true] %s34
      %37 = dma.hbm_to_vmem [thread:$0]  %s33, 16, %s35, [#allocation3]
    $region13: #{actor_continuous_forward.1} parent=1 // pred_fallthru
      _
    // Predicated region
    $region14: #{actor_continuous_forward.1} parent=1 // pred_check
      _
    $region15: #{actor_continuous_forward.1} parent=1 // pred_check_branch
      %39 = sbr.rel (0) target = $region17
    $region16: #{actor_continuous_forward.1} parent=1 // pred_region
      _
    $region17: #{actor_continuous_forward.1} parent=1 // pred_fallthru
      _
    // Predicated region
    $region18: #{actor_continuous_forward.1} parent=1 // pred_check
      _
    $region19: #{actor_continuous_forward.1} parent=1 // pred_check_branch
      %41 = sbr.rel (0) target = $region21
    $region20: #{actor_continuous_forward.1} parent=1 // pred_region
      _
    $region21: #{actor_continuous_forward.1} parent=1 // pred_fallthru
      _
    // Predicated region
    $region22: #{actor_continuous_forward.1} parent=1 // pred_check
      _
    $region23: #{actor_continuous_forward.1} parent=1 // pred_check_branch
      %43 = sbr.rel (0) target = $region25
    $region24: #{actor_continuous_forward.1} parent=1 // pred_region
      %45 = vsyncadd [#allocation5], 0
      %s46 = sshll.u32 %s5, 4
      %s47 = int_to_ptr.hbm [resolvable:$true] %s46
      %s48 = sshll.u32 [#allocation4], 4
      %s49 = int_to_ptr.vmem [resolvable:$true] %s48
      %54 = dma.hbm_to_vmem [thread:$0]  %s47, 4096, %s49, [#allocation5], 128, 128, 8
    $region25: #{actor_continuous_forward.1} parent=1 // pred_fallthru
      _
    // Predicated region
    $region26: #{actor_continuous_forward.1} parent=1 // pred_check
      _
    $region27: #{actor_continuous_forward.1} parent=1 // pred_check_branch
      %56 = sbr.rel (0) target = $region29
    $region28: #{actor_continuous_forward.1} parent=1 // pred_region
      %58 = vsyncadd [#allocation5], 0
      %s60 = sshll.u32 %s6, 4
      %s61 = int_to_ptr.hbm [resolvable:$true] %s60
      %s62 = sshll.u32 [#allocation6], 4
      %s63 = int_to_ptr.vmem [resolvable:$true] %s62
      %65 = dma.hbm_to_vmem [thread:$0]  %s61, 32, %s63, [#allocation5]
    $region29: #{actor_continuous_forward.1} parent=1 // pred_fallthru
      _
    // Predicated region
    $region30: #{actor_continuous_forward.1} parent=1 // pred_check
      _
    $region31: #{actor_continuous_forward.1} parent=1 // pred_check_branch
      %67 = sbr.rel (0) target = $region33
    $region32: #{actor_continuous_forward.1} parent=1 // pred_region
      %69 = vsyncadd [#allocation8], 0
      %s70 = sshll.u32 %s7, 4
      %s71 = int_to_ptr.hbm [resolvable:$true] %s70
      %s72 = sshll.u32 [#allocation7], 4
      %s73 = int_to_ptr.vmem [resolvable:$true] %s72
      %78 = dma.hbm_to_vmem [thread:$0]  %s71, 2048, %s73, [#allocation8], 64, 64, 4
    $region33: #{actor_continuous_forward.1} parent=1 // pred_fallthru
      _
    // Predicated region
    $region34: #{actor_continuous_forward.1} parent=1 // pred_check
      _
    $region35: #{actor_continuous_forward.1} parent=1 // pred_check_branch
      %80 = sbr.rel (0) target = $region37
    $region36: #{actor_continuous_forward.1} parent=1 // pred_region
      %82 = vsyncadd [#allocation8], 0
      %s84 = sshll.u32 %s8, 4
      %s85 = int_to_ptr.hbm [resolvable:$true] %s84
      %s86 = sshll.u32 [#allocation9], 4
      %s87 = int_to_ptr.vmem [resolvable:$true] %s86
      %89 = dma.hbm_to_vmem [thread:$0]  %s85, 16, %s87, [#allocation8]
    $region37: #{actor_continuous_forward.1} parent=1 // pred_fallthru
      _
    // Predicated region
    $region38: #{actor_continuous_forward.1} parent=1 // pred_check
      _
    $region39: #{actor_continuous_forward.1} parent=1 // pred_check_branch
      %91 = sbr.rel (0) target = $region41
    $region40: #{actor_continuous_forward.1} parent=1 // pred_region
      %93 = vsyncadd [#allocation11], 0
      %s94 = sshll.u32 %s9, 4
      %s95 = int_to_ptr.hbm [resolvable:$true] %s94
      %s96 = sshll.u32 [#allocation10], 4
      %s97 = int_to_ptr.vmem [resolvable:$true] %s96
      %102 = dma.hbm_to_vmem [thread:$0]  %s95, 1024, %s97, [#allocation11], 64, 64, 4
    $region41: #{actor_continuous_forward.1} parent=1 // pred_fallthru
      _
    // Predicated region
    $region42: #{actor_continuous_forward.1} parent=1 // pred_check
      _
    $region43: #{actor_continuous_forward.1} parent=1 // pred_check_branch
      %104 = sbr.rel (0) target = $region45
    $region44: #{actor_continuous_forward.1} parent=1 // pred_region
      %106 = vsyncadd [#allocation11], 0
      %s108 = sshll.u32 %s10, 4
      %s109 = int_to_ptr.hbm [resolvable:$true] %s108
      %s110 = sshll.u32 [#allocation12], 4
      %s111 = int_to_ptr.vmem [resolvable:$true] %s110
      %113 = dma.hbm_to_vmem [thread:$0]  %s109, 16, %s111, [#allocation11]
    $region45: #{actor_continuous_forward.1} parent=1 // pred_fallthru
      _
    // Predicated region
    $region46: #{actor_continuous_forward.1} parent=1 // pred_check
      _
    $region47: #{actor_continuous_forward.1} parent=1 // pred_check_branch
      %115 = sbr.rel (0) target = $region49
    $region48: #{actor_continuous_forward.1} parent=1 // pred_region
      %117 = vsyncadd [#allocation14], 0
      %s119 = sshll.u32 %s11, 4
      %s120 = int_to_ptr.hbm [resolvable:$true] %s119
      %s121 = sshll.u32 [#allocation13], 4
      %s122 = int_to_ptr.vmem [resolvable:$true] %s121
      %124 = dma.hbm_to_vmem [thread:$0]  %s120, 16, %s122, [#allocation14]
    $region49: #{actor_continuous_forward.1} parent=1 // pred_fallthru
      _
    // Predicated region
    $region50: #{actor_continuous_forward.1} parent=1 // pred_check
      _
    $region51: #{actor_continuous_forward.1} parent=1 // pred_check_branch
      %126 = sbr.rel (0) target = $region53
    $region52: #{actor_continuous_forward.1} parent=1 // pred_region
      %128 = vsyncadd [#allocation14], 0
      %s130 = sshll.u32 %s12, 4
      %s131 = int_to_ptr.hbm [resolvable:$true] %s130
      %s132 = sshll.u32 [#allocation15], 4
      %s133 = int_to_ptr.vmem [resolvable:$true] %s132
      %135 = dma.hbm_to_vmem [thread:$0]  %s131, 16, %s133, [#allocation14]
    $region53: #{actor_continuous_forward.1} parent=1 // pred_fallthru
      _
    // Predicated region
    $region54: #{actor_continuous_forward.1} parent=1 // pred_check
      _
    $region55: #{actor_continuous_forward.1} parent=1 // pred_check_branch
      %137 = sbr.rel (0) target = $region57
    $region56: #{actor_continuous_forward.1} parent=1 // pred_region
      %139 = dma.done [#allocation3], 16
    $region57: #{actor_continuous_forward.1} parent=1 // pred_fallthru
      _
    // Predicated region
    $region58: #{actor_continuous_forward.1} parent=1 // pred_check
      _
    $region59: #{actor_continuous_forward.1} parent=1 // pred_check_branch
      %141 = sbr.rel (0) target = $region61
    $region60: #{actor_continuous_forward.1} parent=1 // pred_region
      %143 = dma.done [#allocation5], 4096
    $region61: #{actor_continuous_forward.1} parent=1 // pred_fallthru
      _
    // Predicated region
    $region62: #{actor_continuous_forward.1} parent=1 // pred_check
      _
    $region63: #{actor_continuous_forward.1} parent=1 // pred_check_branch
      %145 = sbr.rel (0) target = $region65
    $region64: #{actor_continuous_forward.1} parent=1 // pred_region
      %147 = dma.done [#allocation5], 32
    $region65: #{actor_continuous_forward.1} parent=1 // pred_fallthru
      _
    // Predicated region
    $region66: #{actor_continuous_forward.1} parent=1 // pred_check
      _
    $region67: #{actor_continuous_forward.1} parent=1 // pred_check_branch
      %149 = sbr.rel (0) target = $region69
    $region68: #{actor_continuous_forward.1} parent=1 // pred_region
      %151 = dma.done [#allocation8], 2048
    $region69: #{actor_continuous_forward.1} parent=1 // pred_fallthru
      _
    // Predicated region
    $region70: #{actor_continuous_forward.1} parent=1 // pred_check
      _
    $region71: #{actor_continuous_forward.1} parent=1 // pred_check_branch
      %153 = sbr.rel (0) target = $region73
    $region72: #{actor_continuous_forward.1} parent=1 // pred_region
      %155 = dma.done [#allocation8], 16
    $region73: #{actor_continuous_forward.1} parent=1 // pred_fallthru
      _
    // Predicated region
    $region74: #{actor_continuous_forward.1} parent=1 // pred_check
      _
    $region75: #{actor_continuous_forward.1} parent=1 // pred_check_branch
      %157 = sbr.rel (0) target = $region77
    $region76: #{actor_continuous_forward.1} parent=1 // pred_region
      %159 = dma.done [#allocation11], 1024
    $region77: #{actor_continuous_forward.1} parent=1 // pred_fallthru
      _
    // Predicated region
    $region78: #{actor_continuous_forward.1} parent=1 // pred_check
      _
    $region79: #{actor_continuous_forward.1} parent=1 // pred_check_branch
      %161 = sbr.rel (0) target = $region81
    $region80: #{actor_continuous_forward.1} parent=1 // pred_region
      %163 = dma.done [#allocation11], 16
    $region81: #{actor_continuous_forward.1} parent=1 // pred_fallthru
      _
    // Predicated region
    $region82: #{actor_continuous_forward.1} parent=1 // pred_check
      _
    $region83: #{actor_continuous_forward.1} parent=1 // pred_check_branch
      %165 = sbr.rel (0) target = $region85
    $region84: #{actor_continuous_forward.1} parent=1 // pred_region
      %167 = dma.done [#allocation14], 16
    $region85: #{actor_continuous_forward.1} parent=1 // pred_fallthru
      _
    // Predicated region
    $region86: #{actor_continuous_forward.1} parent=1 // pred_check
      _
    $region87: #{actor_continuous_forward.1} parent=1 // pred_check_branch
      %169 = sbr.rel (0) target = $region89
    $region88: #{actor_continuous_forward.1} parent=1 // pred_region
      %171 = dma.done [#allocation14], 16
    $region89: #{actor_continuous_forward.1} parent=1 // pred_fallthru
      _
    %v173 = vld [vmem:[%s0] sm:$0xff]
    %vm174 = vcmask 130048
    %v175 = vsel %vm174, %v173, 0.0
    %176 = vadd.xlane.f32.xlu0 %v175
    %v177 = vpop.xlane.xlu0 %176
    %v178 = vrcp.pop 16.0
    %v179 = vmul.f32 16.0, %v178
    %v180 = vsub.f32 1.0, %v179
    %v181 = vmul.f32 %v178, %v180
    %v182 = vadd.f32 %v178, %v181
    %vm183 = vweird.f32 %v178
    %v184 = vsel %vm183, %v178, %v182
    %v185 = vmul.f32 %v177, %v184
    %v186 = vsub.f32 %v173, %v185
    %v187 = vmul.f32 %v186, %v186
    %v188 = vsel %vm174, %v187, 0.0
    %189 = vadd.xlane.f32.xlu0 %v188
    %v190 = vpop.xlane.xlu0 %189
    %v191 = vmul.f32 %v190, %v184
    %v192 = vadd.f32 %v191, 1e-05
    %v193 = vrsqrt.pop %v192
    %v194 = vmul.f32 %v193, %v192
    %v195 = vmul.f32 %v194, %v193
    %v196 = vmul.f32 0.5, %v195
    %v197 = vsub.f32 1.5, %v196
    %v198 = vmul.f32 %v193, %v197
    %vm199 = vweird.f32 %v192
    %vm200 = vweird.f32 %v193
    %vm201 = vmor %vm199, %vm200
    %v202 = vsel %vm201, %v193, %v198
    %v203 = vmul.f32 %v186, %v202
    %v204 = vld [vmem:[%s1] sm:$0x1]
    %v206 = vperm.slane %v204, 0
    %v208 = vmul.f32 %v203, %v206
    %v209 = vld [vmem:[#allocation2] sm:$0x1]
    %v211 = vperm.slane %v209, 0
    %v213 = vadd.f32 %v208, %v211
    %v214 = vtanh.pop %v213
    %v215 = vpack.c.bf16 %v214, %v214
    %v216 = vld [vmem:[%s3] sm:$0xff]
    %v217 = vld [vmem:[%s3 + $0x8] sm:$0xff]
    %v218 = vld [vmem:[%s4] sm:$0x3]
    %v220 = vperm.slane %v218, 0
    %v221 = vperm.slane %v218, 1
    %v226 = vunpack.c.l.b16 %v216
    %v227 = vunpack.c.h.b16 %v216
    %v228 = vunpack.c.l.b16 %v217
    %v229 = vunpack.c.h.b16 %v217
    %v230 = vpack.c.b16 %v228, %v226
    %v231 = vpack.c.b16 %v229, %v227
    %v235 = vsel %vm174, %v215, 0
    %237 = vmatpush.bf16.msra.mxu0 0
    %238 = vmatpush.bf16.msra.mxu0 0
    %239 = vmatpush.bf16.msra.mxu0 0
    %240 = vmatpush.bf16.msra.mxu0 0
    %241 = vmatpush.bf16.msra.mxu0 0
    %242 = vmatpush.bf16.msra.mxu0 0
    %243 = vmatpush.bf16.msra.mxu0 0
    %244 = vmatpush.bf16.msra.mxu0 %v230
    %245 = vmatmul.bf16.gmra.mxu0 %v235
    %v246 = vpop.f32.mrf.mxu0
    %v247 = vadd.f32 %v220, %v246
    %v248 = vpop.f32.mrf.mxu0
    %249 = vdwg.mxu0
    %250 = vmatpush.bf16.msra.mxu0 0
    %251 = vmatpush.bf16.msra.mxu0 0
    %252 = vmatpush.bf16.msra.mxu0 0
    %253 = vmatpush.bf16.msra.mxu0 0
    %254 = vmatpush.bf16.msra.mxu0 0
    %255 = vmatpush.bf16.msra.mxu0 0
    %256 = vmatpush.bf16.msra.mxu0 0
    %257 = vmatpush.bf16.msra.mxu0 %v231
    %258 = vmatmul.bf16.gmra.mxu0 %v235
    %v259 = vpop.f32.mrf.mxu0
    %v260 = vadd.f32 %v221, %v259
    %v261 = vpop.f32.mrf.mxu0
    %262 = vdwg.mxu0
    %v263 = vmax.f32 %v247, 0.0
    %v264 = vmax.f32 %v260, 0.0
    %v265 = vpack.c.bf16 %v263, %v263
    %v266 = vpack.c.bf16 %v264, %v264
    %v267 = vld [vmem:[#allocation4] sm:$0xff]
    %v268 = vld [vmem:[#allocation4 + $0x8] sm:$0xff]
    %v269 = vld [vmem:[#allocation4 + $0x10] sm:$0xff]
    %v270 = vld [vmem:[#allocation4 + $0x18] sm:$0xff]
    %v271 = vld [vmem:[#allocation4 + $0x20] sm:$0xff]
    %v272 = vld [vmem:[#allocation4 + $0x28] sm:$0xff]
    %v273 = vld [vmem:[#allocation4 + $0x30] sm:$0xff]
    %v274 = vld [vmem:[#allocation4 + $0x38] sm:$0xff]
    %v275 = vld [vmem:[#allocation4 + $0x40] sm:$0xff]
    %v276 = vld [vmem:[#allocation4 + $0x48] sm:$0xff]
    %v277 = vld [vmem:[#allocation4 + $0x50] sm:$0xff]
    %v278 = vld [vmem:[#allocation4 + $0x58] sm:$0xff]
    %v279 = vld [vmem:[#allocation4 + $0x60] sm:$0xff]
    %v280 = vld [vmem:[#allocation4 + $0x68] sm:$0xff]
    %v281 = vld [vmem:[#allocation4 + $0x70] sm:$0xff]
    %v282 = vld [vmem:[#allocation4 + $0x78] sm:$0xff]
    %v283 = vld [vmem:[#allocation4 + $0x80] sm:$0xff]
    %v284 = vld [vmem:[#allocation4 + $0x88] sm:$0xff]
    %v285 = vld [vmem:[#allocation4 + $0x90] sm:$0xff]
    %v286 = vld [vmem:[#allocation4 + $0x98] sm:$0xff]
    %v287 = vld [vmem:[#allocation4 + $0xa0] sm:$0xff]
    %v288 = vld [vmem:[#allocation4 + $0xa8] sm:$0xff]
    %v289 = vld [vmem:[#allocation4 + $0xb0] sm:$0xff]
    %v290 = vld [vmem:[#allocation4 + $0xb8] sm:$0xff]
    %v291 = vld [vmem:[#allocation4 + $0xc0] sm:$0xff]
    %v292 = vld [vmem:[#allocation4 + $0xc8] sm:$0xff]
    %v293 = vld [vmem:[#allocation4 + $0xd0] sm:$0xff]
    %v294 = vld [vmem:[#allocation4 + $0xd8] sm:$0xff]
    %v295 = vld [vmem:[#allocation4 + $0xe0] sm:$0xff]
    %v296 = vld [vmem:[#allocation4 + $0xe8] sm:$0xff]
    %v297 = vld [vmem:[#allocation4 + $0xf0] sm:$0xff]
    %v298 = vld [vmem:[#allocation4 + $0xf8] sm:$0xff]
    %v299 = vld [vmem:[#allocation6] sm:$0x3]
    %v301 = vperm.slane %v299, 0
    %v302 = vperm.slane %v299, 1
    %v337 = vunpack.c.l.b16 %v267
    %v338 = vunpack.c.h.b16 %v267
    %v339 = vunpack.c.l.b16 %v268
    %v340 = vunpack.c.h.b16 %v268
    %v341 = vunpack.c.l.b16 %v269
    %v342 = vunpack.c.h.b16 %v269
    %v343 = vunpack.c.l.b16 %v270
    %v344 = vunpack.c.h.b16 %v270
    %v345 = vunpack.c.l.b16 %v271
    %v346 = vunpack.c.h.b16 %v271
    %v347 = vunpack.c.l.b16 %v272
    %v348 = vunpack.c.h.b16 %v272
    %v349 = vunpack.c.l.b16 %v273
    %v350 = vunpack.c.h.b16 %v273
    %v351 = vunpack.c.l.b16 %v274
    %v352 = vunpack.c.h.b16 %v274
    %v353 = vunpack.c.l.b16 %v275
    %v354 = vunpack.c.h.b16 %v275
    %v355 = vunpack.c.l.b16 %v276
    %v356 = vunpack.c.h.b16 %v276
    %v357 = vunpack.c.l.b16 %v277
    %v358 = vunpack.c.h.b16 %v277
    %v359 = vunpack.c.l.b16 %v278
    %v360 = vunpack.c.h.b16 %v278
    %v361 = vunpack.c.l.b16 %v279
    %v362 = vunpack.c.h.b16 %v279
    %v363 = vunpack.c.l.b16 %v280
    %v364 = vunpack.c.h.b16 %v280
    %v365 = vunpack.c.l.b16 %v281
    %v366 = vunpack.c.h.b16 %v281
    %v367 = vunpack.c.l.b16 %v282
    %v368 = vunpack.c.h.b16 %v282
    %v369 = vunpack.c.l.b16 %v283
    %v370 = vunpack.c.h.b16 %v283
    %v371 = vunpack.c.l.b16 %v284
    %v372 = vunpack.c.h.b16 %v284
    %v373 = vunpack.c.l.b16 %v285
    %v374 = vunpack.c.h.b16 %v285
    %v375 = vunpack.c.l.b16 %v286
    %v376 = vunpack.c.h.b16 %v286
    %v377 = vunpack.c.l.b16 %v287
    %v378 = vunpack.c.h.b16 %v287
    %v379 = vunpack.c.l.b16 %v288
    %v380 = vunpack.c.h.b16 %v288
    %v381 = vunpack.c.l.b16 %v289
    %v382 = vunpack.c.h.b16 %v289
    %v383 = vunpack.c.l.b16 %v290
    %v384 = vunpack.c.h.b16 %v290
    %v385 = vunpack.c.l.b16 %v291
    %v386 = vunpack.c.h.b16 %v291
    %v387 = vunpack.c.l.b16 %v292
    %v388 = vunpack.c.h.b16 %v292
    %v389 = vunpack.c.l.b16 %v293
    %v390 = vunpack.c.h.b16 %v293
    %v391 = vunpack.c.l.b16 %v294
    %v392 = vunpack.c.h.b16 %v294
    %v393 = vunpack.c.l.b16 %v295
    %v394 = vunpack.c.h.b16 %v295
    %v395 = vunpack.c.l.b16 %v296
    %v396 = vunpack.c.h.b16 %v296
    %v397 = vunpack.c.l.b16 %v297
    %v398 = vunpack.c.h.b16 %v297
    %v399 = vunpack.c.l.b16 %v298
    %v400 = vunpack.c.h.b16 %v298
    %v401 = vpack.c.b16 %v339, %v337
    %v402 = vpack.c.b16 %v340, %v338
    %v403 = vpack.c.b16 %v343, %v341
    %v404 = vpack.c.b16 %v344, %v342
    %v405 = vpack.c.b16 %v347, %v345
    %v406 = vpack.c.b16 %v348, %v346
    %v407 = vpack.c.b16 %v351, %v349
    %v408 = vpack.c.b16 %v352, %v350
    %v409 = vpack.c.b16 %v355, %v353
    %v410 = vpack.c.b16 %v356, %v354
    %v411 = vpack.c.b16 %v359, %v357
    %v412 = vpack.c.b16 %v360, %v358
    %v413 = vpack.c.b16 %v363, %v361
    %v414 = vpack.c.b16 %v364, %v362
    %v415 = vpack.c.b16 %v367, %v365
    %v416 = vpack.c.b16 %v368, %v366
    %v417 = vpack.c.b16 %v371, %v369
    %v418 = vpack.c.b16 %v372, %v370
    %v419 = vpack.c.b16 %v375, %v373
    %v420 = vpack.c.b16 %v376, %v374
    %v421 = vpack.c.b16 %v379, %v377
    %v422 = vpack.c.b16 %v380, %v378
    %v423 = vpack.c.b16 %v383, %v381
    %v424 = vpack.c.b16 %v384, %v382
    %v425 = vpack.c.b16 %v387, %v385
    %v426 = vpack.c.b16 %v388, %v386
    %v427 = vpack.c.b16 %v391, %v389
    %v428 = vpack.c.b16 %v392, %v390
    %v429 = vpack.c.b16 %v395, %v393
    %v430 = vpack.c.b16 %v396, %v394
    %v431 = vpack.c.b16 %v399, %v397
    %v432 = vpack.c.b16 %v400, %v398
    %465 = vmatpush.bf16.msra.mxu0 %v415
    %466 = vmatpush.bf16.msra.mxu0 %v413
    %467 = vmatpush.bf16.msra.mxu0 %v411
    %468 = vmatpush.bf16.msra.mxu0 %v409
    %469 = vmatpush.bf16.msra.mxu0 %v407
    %470 = vmatpush.bf16.msra.mxu0 %v405
    %471 = vmatpush.bf16.msra.mxu0 %v403
    %472 = vmatpush.bf16.msra.mxu0 %v401
    %473 = vmatmul.bf16.gmra.mxu0 %v265
    %v474 = vpop.f32.mrf.mxu0
    %v475 = vadd.f32 %v301, %v474
    %v476 = vpop.f32.mrf.mxu0
    %477 = vdwg.mxu0
    %478 = vmatpush.bf16.msra.mxu0 %v431
    %479 = vmatpush.bf16.msra.mxu0 %v429
    %480 = vmatpush.bf16.msra.mxu0 %v427
    %481 = vmatpush.bf16.msra.mxu0 %v425
    %482 = vmatpush.bf16.msra.mxu0 %v423
    %483 = vmatpush.bf16.msra.mxu0 %v421
    %484 = vmatpush.bf16.msra.mxu0 %v419
    %485 = vmatpush.bf16.msra.mxu0 %v417
    %486 = vmatmul.bf16.gmra.mxu0 %v266
    %v487 = vpop.f32.mrf.mxu0
    %v488 = vadd.f32 %v475, %v487
    %v489 = vpop.f32.mrf.mxu0
    %490 = vdwg.mxu0
    %491 = vmatpush.bf16.msra.mxu0 %v416
    %492 = vmatpush.bf16.msra.mxu0 %v414
    %493 = vmatpush.bf16.msra.mxu0 %v412
    %494 = vmatpush.bf16.msra.mxu0 %v410
    %495 = vmatpush.bf16.msra.mxu0 %v408
    %496 = vmatpush.bf16.msra.mxu0 %v406
    %497 = vmatpush.bf16.msra.mxu0 %v404
    %498 = vmatpush.bf16.msra.mxu0 %v402
    %499 = vmatmul.bf16.gmra.mxu0 %v265
    %v500 = vpop.f32.mrf.mxu0
    %v501 = vadd.f32 %v302, %v500
    %v502 = vpop.f32.mrf.mxu0
    %503 = vdwg.mxu0
    %504 = vmatpush.bf16.msra.mxu0 %v432
    %505 = vmatpush.bf16.msra.mxu0 %v430
    %506 = vmatpush.bf16.msra.mxu0 %v428
    %507 = vmatpush.bf16.msra.mxu0 %v426
    %508 = vmatpush.bf16.msra.mxu0 %v424
    %509 = vmatpush.bf16.msra.mxu0 %v422
    %510 = vmatpush.bf16.msra.mxu0 %v420
    %511 = vmatpush.bf16.msra.mxu0 %v418
    %512 = vmatmul.bf16.gmra.mxu0 %v266
    %v513 = vpop.f32.mrf.mxu0
    %v514 = vadd.f32 %v501, %v513
    %v515 = vpop.f32.mrf.mxu0
    %516 = vdwg.mxu0
    %v517 = vmax.f32 %v488, 0.0
    %v518 = vmax.f32 %v514, 0.0
    %v519 = vpack.c.bf16 %v517, %v517
    %v520 = vpack.c.bf16 %v518, %v518
    %v521 = vld [vmem:[#allocation7] sm:$0xf]
    %v522 = vld [vmem:[#allocation7 + $0x4] sm:$0xf]
    %v523 = vld [vmem:[#allocation7 + $0x8] sm:$0xf]
    %v524 = vld [vmem:[#allocation7 + $0xc] sm:$0xf]
    %v525 = vld [vmem:[#allocation7 + $0x10] sm:$0xf]
    %v526 = vld [vmem:[#allocation7 + $0x14] sm:$0xf]
    %v527 = vld [vmem:[#allocation7 + $0x18] sm:$0xf]
    %v528 = vld [vmem:[#allocation7 + $0x1c] sm:$0xf]
    %v529 = vld [vmem:[#allocation7 + $0x20] sm:$0xf]
    %v530 = vld [vmem:[#allocation7 + $0x24] sm:$0xf]
    %v531 = vld [vmem:[#allocation7 + $0x28] sm:$0xf]
    %v532 = vld [vmem:[#allocation7 + $0x2c] sm:$0xf]
    %v533 = vld [vmem:[#allocation7 + $0x30] sm:$0xf]
    %v534 = vld [vmem:[#allocation7 + $0x34] sm:$0xf]
    %v535 = vld [vmem:[#allocation7 + $0x38] sm:$0xf]
    %v536 = vld [vmem:[#allocation7 + $0x3c] sm:$0xf]
    %v537 = vld [vmem:[#allocation7 + $0x40] sm:$0xf]
    %v538 = vld [vmem:[#allocation7 + $0x44] sm:$0xf]
    %v539 = vld [vmem:[#allocation7 + $0x48] sm:$0xf]
    %v540 = vld [vmem:[#allocation7 + $0x4c] sm:$0xf]
    %v541 = vld [vmem:[#allocation7 + $0x50] sm:$0xf]
    %v542 = vld [vmem:[#allocation7 + $0x54] sm:$0xf]
    %v543 = vld [vmem:[#allocation7 + $0x58] sm:$0xf]
    %v544 = vld [vmem:[#allocation7 + $0x5c] sm:$0xf]
    %v545 = vld [vmem:[#allocation7 + $0x60] sm:$0xf]
    %v546 = vld [vmem:[#allocation7 + $0x64] sm:$0xf]
    %v547 = vld [vmem:[#allocation7 + $0x68] sm:$0xf]
    %v548 = vld [vmem:[#allocation7 + $0x6c] sm:$0xf]
    %v549 = vld [vmem:[#allocation7 + $0x70] sm:$0xf]
    %v550 = vld [vmem:[#allocation7 + $0x74] sm:$0xf]
    %v551 = vld [vmem:[#allocation7 + $0x78] sm:$0xf]
    %v552 = vld [vmem:[#allocation7 + $0x7c] sm:$0xf]
    %v553 = vld [vmem:[#allocation9] sm:$0x1]
    %v555 = vperm.slane %v553, 0
    %v589 = vunpack.c.l.b16 %v521
    %v590 = vunpack.c.l.b16 %v522
    %v591 = vunpack.c.l.b16 %v523
    %v592 = vunpack.c.l.b16 %v524
    %v593 = vunpack.c.l.b16 %v525
    %v594 = vunpack.c.l.b16 %v526
    %v595 = vunpack.c.l.b16 %v527
    %v596 = vunpack.c.l.b16 %v528
    %v597 = vunpack.c.l.b16 %v529
    %v598 = vunpack.c.l.b16 %v530
    %v599 = vunpack.c.l.b16 %v531
    %v600 = vunpack.c.l.b16 %v532
    %v601 = vunpack.c.l.b16 %v533
    %v602 = vunpack.c.l.b16 %v534
    %v603 = vunpack.c.l.b16 %v535
    %v604 = vunpack.c.l.b16 %v536
    %v605 = vunpack.c.l.b16 %v537
    %v606 = vunpack.c.l.b16 %v538
    %v607 = vunpack.c.l.b16 %v539
    %v608 = vunpack.c.l.b16 %v540
    %v609 = vunpack.c.l.b16 %v541
    %v610 = vunpack.c.l.b16 %v542
    %v611 = vunpack.c.l.b16 %v543
    %v612 = vunpack.c.l.b16 %v544
    %v613 = vunpack.c.l.b16 %v545
    %v614 = vunpack.c.l.b16 %v546
    %v615 = vunpack.c.l.b16 %v547
    %v616 = vunpack.c.l.b16 %v548
    %v617 = vunpack.c.l.b16 %v549
    %v618 = vunpack.c.l.b16 %v550
    %v619 = vunpack.c.l.b16 %v551
    %v620 = vunpack.c.l.b16 %v552
    %v621 = vpack.c.b16 %v590, %v589
    %v622 = vpack.c.b16 %v592, %v591
    %v623 = vpack.c.b16 %v594, %v593
    %v624 = vpack.c.b16 %v596, %v595
    %v625 = vpack.c.b16 %v598, %v597
    %v626 = vpack.c.b16 %v600, %v599
    %v627 = vpack.c.b16 %v602, %v601
    %v628 = vpack.c.b16 %v604, %v603
    %v629 = vpack.c.b16 %v606, %v605
    %v630 = vpack.c.b16 %v608, %v607
    %v631 = vpack.c.b16 %v610, %v609
    %v632 = vpack.c.b16 %v612, %v611
    %v633 = vpack.c.b16 %v614, %v613
    %v634 = vpack.c.b16 %v616, %v615
    %v635 = vpack.c.b16 %v618, %v617
    %v636 = vpack.c.b16 %v620, %v619
    %653 = vmatpush.bf16.msra.mxu0 %v628
    %654 = vmatpush.bf16.msra.mxu0 %v627
    %655 = vmatpush.bf16.msra.mxu0 %v626
    %656 = vmatpush.bf16.msra.mxu0 %v625
    %657 = vmatpush.bf16.msra.mxu0 %v624
    %658 = vmatpush.bf16.msra.mxu0 %v623
    %659 = vmatpush.bf16.msra.mxu0 %v622
    %660 = vmatpush.bf16.msra.mxu0 %v621
    %661 = vmatmul.bf16.gmra.mxu0 %v519
    %v662 = vpop.f32.mrf.mxu0
    %v663 = vadd.f32 %v555, %v662
    %v664 = vpop.f32.mrf.mxu0
    %665 = vdwg.mxu0
    %666 = vmatpush.bf16.msra.mxu0 %v636
    %667 = vmatpush.bf16.msra.mxu0 %v635
    %668 = vmatpush.bf16.msra.mxu0 %v634
    %669 = vmatpush.bf16.msra.mxu0 %v633
    %670 = vmatpush.bf16.msra.mxu0 %v632
    %671 = vmatpush.bf16.msra.mxu0 %v631
    %672 = vmatpush.bf16.msra.mxu0 %v630
    %673 = vmatpush.bf16.msra.mxu0 %v629
    %674 = vmatmul.bf16.gmra.mxu0 %v520
    %v675 = vpop.f32.mrf.mxu0
    %v676 = vadd.f32 %v663, %v675
    %v677 = vpop.f32.mrf.mxu0
    %678 = vdwg.mxu0
    %v679 = vmax.f32 %v676, 0.0
    %v680 = vpack.c.bf16 %v679, %v679
    %v681 = vld [vmem:[#allocation10] sm:$0xf]
    %v682 = vld [vmem:[#allocation10 + $0x4] sm:$0xf]
    %v683 = vld [vmem:[#allocation10 + $0x8] sm:$0xf]
    %v684 = vld [vmem:[#allocation10 + $0xc] sm:$0xf]
    %v685 = vld [vmem:[#allocation10 + $0x10] sm:$0xf]
    %v686 = vld [vmem:[#allocation10 + $0x14] sm:$0xf]
    %v687 = vld [vmem:[#allocation10 + $0x18] sm:$0xf]
    %v688 = vld [vmem:[#allocation10 + $0x1c] sm:$0xf]
    %v689 = vld [vmem:[#allocation10 + $0x20] sm:$0xf]
    %v690 = vld [vmem:[#allocation10 + $0x24] sm:$0xf]
    %v691 = vld [vmem:[#allocation10 + $0x28] sm:$0xf]
    %v692 = vld [vmem:[#allocation10 + $0x2c] sm:$0xf]
    %v693 = vld [vmem:[#allocation10 + $0x30] sm:$0xf]
    %v694 = vld [vmem:[#allocation10 + $0x34] sm:$0xf]
    %v695 = vld [vmem:[#allocation10 + $0x38] sm:$0xf]
    %v696 = vld [vmem:[#allocation10 + $0x3c] sm:$0xf]
    %v697 = vld [vmem:[#allocation12] sm:$0x1]
    %v699 = vperm.slane %v697, 0
    %v717 = vunpack.c.l.b16 %v681
    %v718 = vunpack.c.l.b16 %v682
    %v719 = vunpack.c.l.b16 %v683
    %v720 = vunpack.c.l.b16 %v684
    %v721 = vunpack.c.l.b16 %v685
    %v722 = vunpack.c.l.b16 %v686
    %v723 = vunpack.c.l.b16 %v687
    %v724 = vunpack.c.l.b16 %v688
    %v725 = vunpack.c.l.b16 %v689
    %v726 = vunpack.c.l.b16 %v690
    %v727 = vunpack.c.l.b16 %v691
    %v728 = vunpack.c.l.b16 %v692
    %v729 = vunpack.c.l.b16 %v693
    %v730 = vunpack.c.l.b16 %v694
    %v731 = vunpack.c.l.b16 %v695
    %v732 = vunpack.c.l.b16 %v696
    %v733 = vpack.c.b16 %v718, %v717
    %v734 = vpack.c.b16 %v720, %v719
    %v735 = vpack.c.b16 %v722, %v721
    %v736 = vpack.c.b16 %v724, %v723
    %v737 = vpack.c.b16 %v726, %v725
    %v738 = vpack.c.b16 %v728, %v727
    %v739 = vpack.c.b16 %v730, %v729
    %v740 = vpack.c.b16 %v732, %v731
    %749 = vmatpush.bf16.msra.mxu0 %v740
    %750 = vmatpush.bf16.msra.mxu0 %v739
    %751 = vmatpush.bf16.msra.mxu0 %v738
    %752 = vmatpush.bf16.msra.mxu0 %v737
    %753 = vmatpush.bf16.msra.mxu0 %v736
    %754 = vmatpush.bf16.msra.mxu0 %v735
    %755 = vmatpush.bf16.msra.mxu0 %v734
    %756 = vmatpush.bf16.msra.mxu0 %v733
    %757 = vmatmul.bf16.gmra.mxu0 %v680
    %v758 = vpop.f32.mrf.mxu0
    %v759 = vadd.f32 %v699, %v758
    %v760 = vpop.f32.mrf.mxu0
    %761 = vdwg.mxu0
    %v762 = vld [vmem:[#allocation13] sm:$0x1]
    %v763 = vxor.u32 %v759, 2147483648
    %v764 = vmul.f32 %v763, 1.442695
    %v765 = vpow.pop %v764
    %v766 = vadd.f32 %v765, 1.0
    %v767 = vrcp.pop %v766
    %v768 = vmul.f32 %v766, %v767
    %v769 = vsub.f32 1.0, %v768
    %v770 = vmul.f32 %v767, %v769
    %v771 = vadd.f32 %v767, %v770
    %vm772 = vweird.f32 %v766
    %vm773 = vweird.f32 %v767
    %vm774 = vmor %vm772, %vm773
    %v775 = vsel %vm774, %v767, %v771
    %v776 = vand.u32 2147483647, %v766
    %vm777 = vcmp.eq.f32.partialorder %v776, 8.507059e+37
    %v778 = vand.u32 %v766, 2147483648
    %v779 = vor.u32 1.1754944e-38, %v778
    %v780 = vsel %vm777, %v779, %v775
    %v781 = vmul.f32 1.0, %v780
    %v783 = vperm.slane %v762, 0
    %v785 = vmul.f32 %v783, %v781
    %v786 = vld [vmem:[#allocation15] sm:$0x1]
    %v787 = vmax.f32 %v759, 0.0
    %vm788 = vcmp.ne.f32.partialorder %v759, %v759
    %v789 = vadd.f32 %v759, 0.0
    %v790 = vand.u32 2147483647, %v759
    %v791 = vsub.f32 0.0, %v790
    %v792 = vmul.f32 %v791, 1.442695
    %v793 = vpow.pop %v792
    %v794 = vadd.f32 %v793, 1.0
    %v795 = vlog2.pop %v794
    %v796 = vmul.f32 %v795, 0.6931472
    %v797 = vmul.f32 -0.5, %v793
    %v798 = vadd.f32 %v797, 1.0
    %v799 = vmul.f32 %v798, %v793
    %v800 = vand.u32 2147483647, %v793
    %vm801 = vcmp.lt.f32.partialorder %v800, 0.0004427343
    %v802 = vsel %vm801, %v799, %v796
    %v803 = vadd.f32 %v787, %v802
    %v804 = vsel %vm788, %v789, %v803
    %v806 = vperm.slane %v786, 0
    %v808 = vmul.f32 %v806, %v804
    %v809 = vadd.f32 %v785, %v808
    %810 = vst [vmem:[%s13] sm:$0xff] %v809
    // Predicated region
    $region90: #{actor_continuous_forward.1} parent=1 // pred_check
      _
    $region91: #{actor_continuous_forward.1} parent=1 // pred_check_branch
      %812 = sbr.rel (0) target = $region93
    $region92: #{actor_continuous_forward.1} parent=1 // pred_region
      _
    $region93: #{actor_continuous_forward.1} parent=1 // pred_fallthru
      _
    // Predicated region
    $region94: #{actor_continuous_forward.1} parent=1 // pred_check
      _
    $region95: #{actor_continuous_forward.1} parent=1 // pred_check_branch
      %814 = sbr.rel (0) target = $region97
    $region96: #{actor_continuous_forward.1} parent=1 // pred_region
      _
    $region97: #{actor_continuous_forward.1} parent=1 // pred_fallthru
      _
    %815 = vsyncpa [#allocation3], 1
    %816 = vsyncpa [#allocation5], 1
    %817 = vsyncpa [#allocation8], 1
    %818 = vsyncpa [#allocation11], 1
    %819 = vsyncpa [#allocation14], 1

</llo_original>
